<compile_context>
chip_gen: v6e
topology: v6e:2x2x1
jax: 0.10.0
libtpu: 0.0.40
codegen_flags: <defaults>
</compile_context>

<pallas_src>
import functools

import jax
import jax.numpy as jnp
from jax.experimental import pallas as pl
from jax.experimental.pallas import tpu as pltpu


def _round_up(x, m):
    return ((x + m - 1) // m) * m


def _choose_tn(cp):
    # cp is always a multiple of 128; pick the largest lane-dense divisor.
    for tn in (512, 384, 256, 128):
        if cp % tn == 0:
            return tn
    return 128


def _vmem_budget_bytes():
    # Generation-aware VMEM budget (v7x: 64 MiB, v5e/v6e: 128 MiB), with
    # headroom for compiler internals.  Conservative fallback = v7x.
    cap = 64 * 1024 * 1024
    try:
        info = pltpu.get_tpu_info()
        cap = int(getattr(info, "vmem_capacity_bytes", cap))
    except Exception:
        pass
    return int(min(cap * 3 // 4, 100 * 1024 * 1024))


# ----------------------------- kernel ---------------------------------------


def _linear_kernel(x_ref, w_ref, b_ref, o_ref, *, tm, x_resident):
    # out = x @ W + b   (MXU matmul, f32 accumulation, f32 bias add).
    # x is cast in-kernel to the streamed weight dtype (bf16 by default) so the
    # wrapper never makes an extra HBM copy of the activations.
    if x_resident:
        i = pl.program_id(1)
        row0 = pl.multiple_of(i * tm, tm)
        x = x_ref[pl.ds(row0, tm), :]
    else:
        x = x_ref[...]
    acc = jnp.dot(x.astype(w_ref.dtype), w_ref[...],
                  preferred_element_type=jnp.float32)
    o_ref[...] = (acc + b_ref[...]).astype(o_ref.dtype)


# ---------------------- one-time parameter preparation ----------------------


def prepare_params(params, cls_type="linear", weight_dtype=jnp.bfloat16):
    """Transform PyTorch-layout params into the kernel layout (ONE TIME).

    * transpose to (D, C) and zero-pad both dims to multiples of 128,
    * fold the weight_norm scale g * v/||v|| directly into the weight
      (weights are static at inference, so this preserves forward semantics),
    * downcast the streamed weight to `weight_dtype` (bf16 default; pass
      jnp.float32 for an exact path).  Bias stays f32.
    """
    if cls_type == "wn":
        v = params["weight_v"].astype(jnp.float32)                 # (C, D)
        g = params["weight_g"].reshape(-1, 1).astype(jnp.float32)  # (C, 1)
        norm = jnp.sqrt(jnp.maximum(jnp.sum(v * v, axis=1, keepdims=True),
                                    1e-30))
        w = v * (g / norm)
    else:
        w = params["weight"].astype(jnp.float32)                   # (C, D)
    b = params["bias"].astype(jnp.float32)                         # (C,)

    C, D = w.shape
    Cp = _round_up(C, 128)
    Dp = _round_up(D, 128)

    wt = jnp.pad(w.T, ((0, Dp - D), (0, Cp - C)))                  # (Dp, Cp)
    if weight_dtype is not None:
        wt = wt.astype(weight_dtype)
    bp = jnp.pad(b, (0, Cp - C)).reshape(1, Cp)                    # (1, Cp) f32
    return {"w_t": wt, "bias": bp}


# ----------------------------- forward ---------------------------------------


@functools.partial(jax.jit, static_argnames=("class_num", "force_stream"))
def feat_classifier_forward(x, prepared, class_num, force_stream=False):
    """Pallas forward of feat_classifier.

    x:        (B, D) activations (f32 or bf16).
    prepared: output of prepare_params() (WN scale already folded in).
    """
    B, D = x.shape
    w = prepared["w_t"]                    # (Dp, Cp), bf16 by default
    b = prepared["bias"]                   # (1, Cp), f32
    Dp, Cp = w.shape
    out_dtype = x.dtype

    # ---- class tiling (lane-dense, up to 512 wide) ----
    TN = _choose_tn(Cp)
    nc = Cp // TN

    # ---- batch tiling: minimize padding, respect sublane packing ----
    sub = {4: 8, 2: 16, 1: 32}.get(x.dtype.itemsize, 8)
    nb = max(1, -(-B // 512))              # target <=512 rows per tile
    TM = _round_up(-(-B // nb), sub)
    Bp = TM * nb

    # ---- generation-aware VMEM budgeting ----
    xb = x.dtype.itemsize
    wb = w.dtype.itemsize
    ob = jnp.dtype(out_dtype).itemsize
    budget = _vmem_budget_bytes()
    w_bufs = 3 if (nb == 1 and nc >= 3) else 2       # deeper weight prefetch
    fixed = w_bufs * Dp * TN * wb + 2 * TM * TN * ob + 4 * TN * 4
    x_resident = (not force_stream) and (2 * Bp * Dp * xb + fixed) <= budget

    # ---- pad activations only when needed (skip the copy when aligned) ----
    if (Bp, Dp) != (B, D):
        x_p = jnp.pad(x, ((0, Bp - B), (0, Dp - D)))
    else:
        x_p = x

    # grid = (class tiles, batch tiles); batch innermost so the weight tile
    # stays resident across batch tiles.
    if x_resident:
        # x DMA'd once (constant block index), sliced in-kernel per batch tile.
        x_spec = pl.BlockSpec((Bp, Dp), lambda j, i: (0, 0))
    else:
        x_spec = pl.BlockSpec((TM, Dp), lambda j, i: (i, 0))
    if w_bufs == 3:
        w_spec = pl.BlockSpec((Dp, TN), lambda j, i: (0, j),
                              pipeline_mode=pl.Buffered(3))
    else:
        w_spec = pl.BlockSpec((Dp, TN), lambda j, i: (0, j))
    b_spec = pl.BlockSpec((1, TN), lambda j, i: (0, j))
    out_spec = pl.BlockSpec((TM, TN), lambda j, i: (i, j))

    cost = pl.CostEstimate(
        flops=2 * Bp * Dp * Cp,
        transcendentals=0,
        bytes_accessed=(Bp * Dp * xb * (1 if x_resident else nc)
                        + Dp * Cp * wb + Bp * Cp * ob + Cp * 4))

    out_p = pl.pallas_call(
        functools.partial(_linear_kernel, tm=TM, x_resident=x_resident),
        out_shape=jax.ShapeDtypeStruct((Bp, Cp), out_dtype),
        grid=(nc, nb),
        in_specs=[x_spec, w_spec, b_spec],
        out_specs=out_spec,
        compiler_params=pltpu.CompilerParams(
            dimension_semantics=("parallel", "parallel"),
            vmem_limit_bytes=budget),
        cost_estimate=cost,
    )(x_p, w, b)

    if (Bp, Cp) != (B, class_num):
        out_p = out_p[:B, :class_num]
    return out_p


# ------------------------- deterministic init -------------------------------


def init_params(key, class_num, bottleneck_dim, cls_type="linear"):
    """Mimic nn.Linear default init: U(-1/sqrt(in), 1/sqrt(in)); PyTorch layout."""
    kw, kb = jax.random.split(key, 2)
    bound = 1.0 / jnp.sqrt(jnp.float32(bottleneck_dim))
    weight = jax.random.uniform(
        kw, (class_num, bottleneck_dim), jnp.float32, -bound, bound)
    bias = jax.random.uniform(kb, (class_num,), jnp.float32, -bound, bound)
    if cls_type == "wn":
        # weight_norm reparameterization: v = weight, g = ||weight|| per row.
        g = jnp.sqrt(jnp.sum(weight * weight, axis=1, keepdims=True))  # (C, 1)
        return {"weight_v": weight, "weight_g": g, "bias": bias}
    return {"weight": weight, "bias": bias}


# ----------------------------- reference ------------------------------------


def feat_classifier_ref(x, params, cls_type="linear"):
    if cls_type == "wn":
        v = params["weight_v"]
        g = params["weight_g"]
        w = v * (g / jnp.sqrt(jnp.sum(v * v, axis=1, keepdims=True)))
    else:
        w = params["weight"]
    return x @ w.T + params["bias"]


# --------------------------------- main --------------------------------------


if __name__ == "__main__":
    key = jax.random.PRNGKey(0)
    ok = True

    # 1) exact (f32-weight) paths: small padded shape + WN with awkward sizes.
    for (batch, dim, classes, ctype) in [(8, 32, 16, "linear"),
                                         (300, 96, 300, "wn")]:
        kx, kp, key = jax.random.split(key, 3)
        x = jax.random.normal(kx, (batch, dim), jnp.float32)
        p = init_params(kp, classes, dim, ctype)
        prep = prepare_params(p, ctype, weight_dtype=jnp.float32)
        out = feat_classifier_forward(x, prep, class_num=classes)
        jax.block_until_ready(out)
        ref = feat_classifier_ref(x, p, ctype)
        ok &= bool(jnp.allclose(out, ref, atol=1e-4, rtol=1e-4))

    # 2) default bf16 weight path, multiple class tiles (exercises the
    #    triple-buffered weight stream), looser tolerance.
    kx, kp, key = jax.random.split(key, 3)
    x = jax.random.normal(kx, (64, 256), jnp.float32)
    p = init_params(kp, 1536, 256, "linear")
    prep = prepare_params(p, "linear")              # bf16 default
    out = feat_classifier_forward(x, prep, class_num=1536)
    jax.block_until_ready(out)
    ref = feat_classifier_ref(x, p, "linear")
    ok &= bool(jnp.allclose(out, ref, atol=3e-2, rtol=3e-2))

    # 3) bf16 WN with two batch tiles (in-kernel pl.ds slicing of resident x).
    kx, kp, key = jax.random.split(key, 3)
    x = jax.random.normal(kx, (600, 256), jnp.float32)
    p = init_params(kp, 384, 256, "wn")
    prep = prepare_params(p, "wn")
    out = feat_classifier_forward(x, prep, class_num=384)
    jax.block_until_ready(out)
    ref = feat_classifier_ref(x, p, "wn")
    ok &= bool(jnp.allclose(out, ref, atol=3e-2, rtol=3e-2))

    # 4) streamed-x fallback path (forced) for coverage.
    kx, kp, key = jax.random.split(key, 3)
    x = jax.random.normal(kx, (300, 96), jnp.float32)
    p = init_params(kp, 300, 96, "linear")
    prep = prepare_params(p, "linear", weight_dtype=jnp.float32)
    out = feat_classifier_forward(x, prep, class_num=300, force_stream=True)
    jax.block_until_ready(out)
    ref = feat_classifier_ref(x, p, "linear")
    ok &= bool(jnp.allclose(out, ref, atol=1e-4, rtol=1e-4))

    print("KERNEL_OK" if ok else "KERNEL_MISMATCH")
</pallas_src>

<mosaic_0001>
module attributes {stable_mosaic.version = 11 : i64} {
  func.func @_linear_kernel(%arg0: i32, %arg1: i32, %arg2: memref<8x128xf32, #tpu.memory_space<vmem>>, %arg3: memref<128x128xf32, #tpu.memory_space<vmem>>, %arg4: memref<1x128xf32, #tpu.memory_space<vmem>>, %arg5: memref<8x128xf32, #tpu.memory_space<vmem>>) attributes {dimension_semantics = [#tpu.dimension_semantics<parallel>, #tpu.dimension_semantics<parallel>], iteration_bounds = array<i64: 1, 1>, scalar_prefetch = 0 : i64, scratch_operands = 0 : i64, tpu.core_type = #tpu.core_type<tc>, window_params = [{pipeline_mode = #tpu.pipeline_mode<synchronous>, transform_indices = @transform_0, window_bounds = array<i64: 8, 128>}, {transform_indices = @transform_1, window_bounds = array<i64: 128, 128>}, {transform_indices = @transform_2, window_bounds = array<i64: 1, 128>}, {transform_indices = @transform_3, window_bounds = array<i64: 8, 128>}]} {
    %c8_i32 = arith.constant 8 : i32
    %0 = arith.muli %arg1, %c8_i32 : i32
    %1 = tpu.assume_multiple %0, 8 : i32
    %2 = arith.index_cast %1 : i32 to index
    %c0 = arith.constant 0 : index
    %3 = vector.load %arg2[%2, %c0] : memref<8x128xf32, #tpu.memory_space<vmem>>, vector<8x128xf32>
    %c0_0 = arith.constant 0 : index
    %c0_1 = arith.constant 0 : index
    %4 = vector.load %arg3[%c0_0, %c0_1] : memref<128x128xf32, #tpu.memory_space<vmem>>, vector<128x128xf32>
    %cst = arith.constant dense<0.000000e+00> : vector<8x128xf32>
    %5 = tpu.matmul %3, %4, %cst {dimension_numbers = #tpu.dot_dimension_numbers<[1], [0], [0], [1], [0, 0, 1, 1], [], []>} : vector<8x128xf32>, vector<128x128xf32>, vector<8x128xf32> -> vector<8x128xf32>
    %c0_2 = arith.constant 0 : index
    %c0_3 = arith.constant 0 : index
    %6 = vector.load %arg4[%c0_2, %c0_3] : memref<1x128xf32, #tpu.memory_space<vmem>>, vector<1x128xf32>
    %7 = vector.broadcast %6 : vector<1x128xf32> to vector<8x128xf32>
    %8 = arith.addf %5, %7 : vector<8x128xf32>
    %c0_4 = arith.constant 0 : index
    %c0_5 = arith.constant 0 : index
    %9 = vector.load %arg5[%c0_4, %c0_5] : memref<8x128xf32, #tpu.memory_space<vmem>>, vector<8x128xf32>
    tpu.vector_store %arg5[%c0_4, %c0_5], %8 {strides = array<i32>} : memref<8x128xf32, #tpu.memory_space<vmem>>, vector<8x128xf32>,
    return
  }
  func.func @transform_0(%arg0: i32, %arg1: i32) -> (i32, i32) {
    %c0_i32 = arith.constant 0 : i32
    %c0_i32_0 = arith.constant 0 : i32
    %c0_i32_1 = arith.constant 0 : i32
    return %c0_i32, %c0_i32_0 : i32, i32
  }
  func.func @transform_1(%arg0: i32, %arg1: i32) -> (i32, i32) {
    %c0_i32 = arith.constant 0 : i32
    %c0_i32_0 = arith.constant 0 : i32
    return %c0_i32, %arg0 : i32, i32
  }
  func.func @transform_2(%arg0: i32, %arg1: i32) -> (i32, i32) {
    %c0_i32 = arith.constant 0 : i32
    %c0_i32_0 = arith.constant 0 : i32
    return %c0_i32, %arg0 : i32, i32
  }
  func.func @transform_3(%arg0: i32, %arg1: i32) -> (i32, i32) {
    %c0_i32 = arith.constant 0 : i32
    return %arg1, %arg0 : i32, i32
  }
}

</mosaic_0001>

<llo_original>
// kernel: feat_classifier_forward.1
$region0: #{feat_classifier_forward.1}
  #allocation0 [shape = 'u32[]', space=smem, size = 0x4, offset = 0x4, fixed_abs, tag = 'smem constant byte address 0x4 - core index']
  #allocation1 [shape = 'u32[144,128]{1,0:T(1,128)}', space=vmem, size = 0x12000, scoped, tag = 'internal scratch']
  %s0 = inlined_call_operand.vmem [shape: f32[8,128], index: 0, kind: input, shape index: {}]
  %s1 = inlined_call_operand.hbm [shape: f32[128,128], index: 1, kind: input, shape index: {}]
  %s2 = inlined_call_operand.vmem [shape: f32[1,128], index: 2, kind: input, shape index: {}]
  %s3 = inlined_call_operand.hbm [shape: f32[8,128], index: 3, kind: output, shape index: {}]
  %s4 = sld [smem:[#allocation0]]
  $region26: #{feat_classifier_forward.1} parent=0
    _
  %s6 = ssub.s32 1, %s4
  %s7 = scalar_select 0, %s6, %s4
  $region1: #{feat_classifier_forward.1} parent=0
    #allocation2 [shape = 'u8[65536]{0}', space=vmem, size = 0x10000, scoped, tag = 'input window, operand 1, single buffered']
    #allocation3 [shape = 's32[1]{0}', space=sflag, size = 0x4, scoped, tag = 'scoped memory for feat_classifier_forward.1']
    #allocation4 [shape = 's32[1]{0}', space=sflag, size = 0x4, scoped, tag = 'scoped memory for feat_classifier_forward.1']
    #allocation5 [shape = 'u8[4096]{0}', space=vmem, size = 0x1000, scoped, tag = 'output window, operand 0, single buffered']
    %8 = vsyncpa [#allocation3], 0
    %9 = vsyncpa [#allocation4], 0
    // Predicated region
    $region2: #{feat_classifier_forward.1} parent=1 // pred_check
      _
    $region3: #{feat_classifier_forward.1} parent=1 // pred_check_branch
      %11 = sbr.rel (0) target = $region5
    $region4: #{feat_classifier_forward.1} parent=1 // pred_region
      _
    $region5: #{feat_classifier_forward.1} parent=1 // pred_fallthru
      _
    // Predicated region
    $region6: #{feat_classifier_forward.1} parent=1 // pred_check
      _
    $region7: #{feat_classifier_forward.1} parent=1 // pred_check_branch
      %13 = sbr.rel (0) target = $region9
    $region8: #{feat_classifier_forward.1} parent=1 // pred_region
      %s15 = ssub.s32 2048, 2048
      %16 = vsyncadd [#allocation3], %s15
      %s17 = sshll.u32 [#allocation2], 4
      %s18 = int_to_ptr.vmem [resolvable:$true] %s17
      %23 = dma.hbm_to_vmem [thread:$0]  %s1, 2048, %s18, [#allocation3], 128, 128, 8
    $region9: #{feat_classifier_forward.1} parent=1 // pred_fallthru
      _
    // Predicated region
    $region10: #{feat_classifier_forward.1} parent=1 // pred_check
      _
    $region11: #{feat_classifier_forward.1} parent=1 // pred_check_branch
      %25 = sbr.rel (0) target = $region13
    $region12: #{feat_classifier_forward.1} parent=1 // pred_region
      _
    $region13: #{feat_classifier_forward.1} parent=1 // pred_fallthru
      _
    // Predicated region
    $region14: #{feat_classifier_forward.1} parent=1 // pred_check
      _
    $region15: #{feat_classifier_forward.1} parent=1 // pred_check_branch
      %27 = sbr.rel (0) target = $region17
    $region16: #{feat_classifier_forward.1} parent=1 // pred_region
      %28 = dma.done [#allocation3], 2048
    $region17: #{feat_classifier_forward.1} parent=1 // pred_fallthru
      _
    %s29 = smul.u32 0, 8
    %s30 = scalar_lea.vmem %s0, %s29
    %v31 = vld [vmem:[%s30] sm:$0xff]
    %v32 = vld [vmem:[#allocation2] sm:$0xff]
    %v33 = vld [vmem:[#allocation2 + $0x8] sm:$0xff]
    %v34 = vld [vmem:[#allocation2 + $0x10] sm:$0xff]
    %v35 = vld [vmem:[#allocation2 + $0x18] sm:$0xff]
    %v36 = vld [vmem:[#allocation2 + $0x20] sm:$0xff]
    %v37 = vld [vmem:[#allocation2 + $0x28] sm:$0xff]
    %v38 = vld [vmem:[#allocation2 + $0x30] sm:$0xff]
    %v39 = vld [vmem:[#allocation2 + $0x38] sm:$0xff]
    %v40 = vld [vmem:[#allocation2 + $0x40] sm:$0xff]
    %v41 = vld [vmem:[#allocation2 + $0x48] sm:$0xff]
    %v42 = vld [vmem:[#allocation2 + $0x50] sm:$0xff]
    %v43 = vld [vmem:[#allocation2 + $0x58] sm:$0xff]
    %v44 = vld [vmem:[#allocation2 + $0x60] sm:$0xff]
    %v45 = vld [vmem:[#allocation2 + $0x68] sm:$0xff]
    %v46 = vld [vmem:[#allocation2 + $0x70] sm:$0xff]
    %v47 = vld [vmem:[#allocation2 + $0x78] sm:$0xff]
    %v48 = vld [vmem:[%s2] sm:$0x1]
    %v50 = vlaneseq
    %v51 = vshrl.u32 %v50, 7
    %v52 = vsub.s32 0, %v51
    %v53 = vrot.slane %v48, %v52
    %55 = vmatprep.subr.mxu0 0.0
    %56 = vmatpush1.msra.mxu0 %v47
    %57 = vmatprep.subr.mxu0 0.0
    %58 = vmatpush1.msra.mxu0 %v46
    %59 = vmatprep.subr.mxu0 0.0
    %60 = vmatpush1.msra.mxu0 %v45
    %61 = vmatprep.subr.mxu0 0.0
    %62 = vmatpush1.msra.mxu0 %v44
    %63 = vmatprep.subr.mxu0 0.0
    %64 = vmatpush1.msra.mxu0 %v43
    %65 = vmatprep.subr.mxu0 0.0
    %66 = vmatpush1.msra.mxu0 %v42
    %67 = vmatprep.subr.mxu0 0.0
    %68 = vmatpush1.msra.mxu0 %v41
    %69 = vmatprep.subr.mxu0 0.0
    %70 = vmatpush1.msra.mxu0 %v40
    %71 = vmatprep.subr.mxu0 0.0
    %72 = vmatpush1.msra.mxu0 %v39
    %73 = vmatprep.subr.mxu0 0.0
    %74 = vmatpush1.msra.mxu0 %v38
    %75 = vmatprep.subr.mxu0 0.0
    %76 = vmatpush1.msra.mxu0 %v37
    %77 = vmatprep.subr.mxu0 0.0
    %78 = vmatpush1.msra.mxu0 %v36
    %79 = vmatprep.subr.mxu0 0.0
    %80 = vmatpush1.msra.mxu0 %v35
    %81 = vmatprep.subr.mxu0 0.0
    %82 = vmatpush1.msra.mxu0 %v34
    %83 = vmatprep.subr.mxu0 0.0
    %84 = vmatpush1.msra.mxu0 %v33
    %85 = vmatprep.subr.mxu0 0.0
    %86 = vmatpush1.msra.mxu0 %v32
    %87 = vmatprep.subr.mxu0 0.0
    %88 = vmatpush2.msra.mxu0 0.0
    %89 = vmatprep.subr.mxu0 0.0
    %90 = vmatpush2.msra.mxu0 0.0
    %91 = vmatprep.subr.mxu0 0.0
    %92 = vmatpush2.msra.mxu0 0.0
    %93 = vmatprep.subr.mxu0 0.0
    %94 = vmatpush2.msra.mxu0 0.0
    %95 = vmatprep.subr.mxu0 0.0
    %96 = vmatpush2.msra.mxu0 0.0
    %97 = vmatprep.subr.mxu0 0.0
    %98 = vmatpush2.msra.mxu0 0.0
    %99 = vmatprep.subr.mxu0 0.0
    %100 = vmatpush2.msra.mxu0 0.0
    %101 = vmatprep.subr.mxu0 0.0
    %102 = vmatpush2.msra.mxu0 0.0
    %103 = vmatprep.subr.mxu0 0.0
    %104 = vmatpush2.msra.mxu0 0.0
    %105 = vmatprep.subr.mxu0 0.0
    %106 = vmatpush2.msra.mxu0 0.0
    %107 = vmatprep.subr.mxu0 0.0
    %108 = vmatpush2.msra.mxu0 0.0
    %109 = vmatprep.subr.mxu0 0.0
    %110 = vmatpush2.msra.mxu0 0.0
    %111 = vmatprep.subr.mxu0 0.0
    %112 = vmatpush2.msra.mxu0 0.0
    %113 = vmatprep.subr.mxu0 0.0
    %114 = vmatpush2.msra.mxu0 0.0
    %115 = vmatprep.subr.mxu0 0.0
    %116 = vmatpush2.msra.mxu0 0.0
    %117 = vmatprep.subr.mxu0 0.0
    %118 = vmatpush2.msra.mxu0 0.0
    %119 = vmatprep.mubr.f32.mxu0 0.0
    %120 = vmatmul.mubr.f32.gmra.mxu0 %v31
    %v121 = vpop.f32.mrf.mxu0
    %v122 = vadd.f32 %v53, %v121
    %v123 = vpop.f32.mrf.mxu0
    %124 = vdwg.mxu0
    %125 = vst [vmem:[#allocation5] sm:$0xff] %v122
    // Predicated region
    $region18: #{feat_classifier_forward.1} parent=1 // pred_check
      _
    $region19: #{feat_classifier_forward.1} parent=1 // pred_check_branch
      %127 = sbr.rel (0) target = $region21
    $region20: #{feat_classifier_forward.1} parent=1 // pred_region
      %s129 = ssub.s32 128, 128
      %130 = vsyncadd [#allocation4], %s129
      %s132 = sshll.u32 [#allocation5], 4
      %s133 = int_to_ptr.vmem [resolvable:$true] %s132
      %135 = dma.vmem_to_hbm [thread:$0]  %s133, 128, %s3, [#allocation4]
    $region21: #{feat_classifier_forward.1} parent=1 // pred_fallthru
      _
    // Predicated region
    $region22: #{feat_classifier_forward.1} parent=1 // pred_check
      _
    $region23: #{feat_classifier_forward.1} parent=1 // pred_check_branch
      %137 = sbr.rel (0) target = $region25
    $region24: #{feat_classifier_forward.1} parent=1 // pred_region
      %138 = dma.done [#allocation4], 128
    $region25: #{feat_classifier_forward.1} parent=1 // pred_fallthru
      _
    %139 = vsyncpa [#allocation3], 1
    %140 = vsyncpa [#allocation4], 1

</llo_original>
